<compile_context>
chip_gen: v5e
topology: v5e:2x2
jax: 0.10.0
libtpu: 0.0.40
codegen_flags: <defaults>
</compile_context>

<pallas_src>
import jax
import jax.numpy as jnp
from jax.experimental import pallas as pl
from jax.experimental.pallas import tpu as pltpu


def dualcifar4_kernel(fdx_ref, pdx_ref, w1a_ref, w1b_ref, b1_ref,
                      w2_ref, b2_ref, o_ref):
    # Linear1 on the (virtually) concatenated input, without a concat:
    #   [FDx | PDx] @ W1 == FDx @ W1[:nc] + PDx @ W1[nc:]
    h = (jnp.dot(fdx_ref[...], w1a_ref[...], preferred_element_type=jnp.float32)
         + jnp.dot(pdx_ref[...], w1b_ref[...], preferred_element_type=jnp.float32)
         + b1_ref[...])
    # ReLU (f32 elementwise on the VPU — negligible next to the DMA traffic).
    h = jnp.maximum(h, 0.0)
    # Linear: h @ W2 + b2.
    o_ref[...] = (jnp.dot(h, w2_ref[...], preferred_element_type=jnp.float32)
                  + b2_ref[...]).astype(o_ref.dtype)


def dualcifar4_forward(fdx, pdx, w1, b1, w2, b2, *, block_b=1024):
    """Forward pass of DualCIFAR4.

    fdx, pdx : [B, num_class] f32
    w1       : [2*num_class, 2*num_class]  (== PyTorch Linear1.weight.T)
    b1       : [1, 2*num_class]
    w2       : [2*num_class, C_Number]     (== PyTorch Linear.weight.T)
    b2       : [1, C_Number]
    returns  : [B, C_Number] f32
    """
    B, nc = fdx.shape
    d = 2 * nc
    c_number = w2.shape[1]
    assert pdx.shape == (B, nc)
    assert w1.shape == (d, d) and b1.shape == (1, d)
    assert w2.shape == (d, c_number) and b2.shape == (1, c_number)
    assert block_b % 8 == 0, "block_b must be a multiple of 8 (sublane constraint)"

    # Split W1 so the kernel never has to concatenate FDx/PDx along lanes.
    w1a = w1[:nc, :]   # multiplies FDx
    w1b = w1[nc:, :]   # multiplies PDx

    # Batch tiling: one grid step if B is small (block == full array dim is
    # always legal), otherwise TB-row tiles (multiple of 8) with zero-padding
    # of the ragged tail.  Padded rows produce garbage that is sliced off.
    if B <= block_b:
        tb = B
        b_padded = B
    else:
        tb = block_b
        b_padded = pl.cdiv(B, tb) * tb
        pad = b_padded - B
        if pad:
            fdx = jnp.pad(fdx, ((0, pad), (0, 0)))
            pdx = jnp.pad(pdx, ((0, pad), (0, 0)))

    grid = (b_padded // tb,)

    act_spec = lambda cols: pl.BlockSpec((tb, cols), lambda i: (i, 0))
    # Weights / biases: constant block index -> loaded once, VMEM-resident.
    res_spec = lambda r, c: pl.BlockSpec((r, c), lambda i: (0, 0))

    out = pl.pallas_call(
        dualcifar4_kernel,
        out_shape=jax.ShapeDtypeStruct((b_padded, c_number), jnp.float32),
        grid_spec=pltpu.PrefetchScalarGridSpec(
            num_scalar_prefetch=0,
            grid=grid,
            in_specs=[
                act_spec(nc),            # FDx tile
                act_spec(nc),            # PDx tile
                res_spec(nc, d),         # W1[:nc]
                res_spec(nc, d),         # W1[nc:]
                res_spec(1, d),          # b1
                res_spec(d, c_number),   # W2
                res_spec(1, c_number),   # b2
            ],
            out_specs=act_spec(c_number),
        ),
        compiler_params=pltpu.CompilerParams(
            dimension_semantics=("parallel",),
        ),
    )(fdx, pdx, w1a, w1b, b1, w2, b2)

    return out[:B]


def _reference(fdx, pdx, w1, b1, w2, b2):
    x = jnp.concatenate([fdx, pdx], axis=1)
    return jnp.maximum(x @ w1 + b1, 0.0) @ w2 + b2


if __name__ == "__main__":
    num_class = 10
    C_Number = 3
    D = 2 * num_class  # 20

    key = jax.random.PRNGKey(0)
    k_fd, k_pd, k_w1, k_w2, k_fd2, k_pd2 = jax.random.split(key, 6)

    # Deterministic parameter init (Linear weights ~ N(0, 0.01), zero bias,
    # mirroring the module's _initialize_weights convention).
    W1 = 0.01 * jax.random.normal(k_w1, (D, D), dtype=jnp.float32)          # [in, out]
    b1 = jnp.zeros((1, D), dtype=jnp.float32)
    W2 = 0.01 * jax.random.normal(k_w2, (D, C_Number), dtype=jnp.float32)   # [in, out]
    b2 = jnp.zeros((1, C_Number), dtype=jnp.float32)

    # Case 1: tiny batch (single grid step, block == full batch).
    B = 2
    FDx = jax.random.normal(k_fd, (B, num_class), dtype=jnp.float32)
    PDx = jax.random.normal(k_pd, (B, num_class), dtype=jnp.float32)
    out = jax.block_until_ready(dualcifar4_forward(FDx, PDx, W1, b1, W2, b2))
    ref = _reference(FDx, PDx, W1, b1, W2, b2)
    assert out.shape == (B, C_Number)
    assert jnp.allclose(out, ref, atol=1e-5, rtol=1e-5)

    # Case 2: batched path exercising the grid (small block to keep it cheap),
    # including a ragged tail (B2 not a multiple of the block).
    B2 = 72
    FDx2 = jax.random.normal(k_fd2, (B2, num_class), dtype=jnp.float32)
    PDx2 = jax.random.normal(k_pd2, (B2, num_class), dtype=jnp.float32)
    out2 = jax.block_until_ready(
        dualcifar4_forward(FDx2, PDx2, W1, b1, W2, b2, block_b=16))
    ref2 = _reference(FDx2, PDx2, W1, b1, W2, b2)
    assert out2.shape == (B2, C_Number)
    assert jnp.allclose(out2, ref2, atol=1e-5, rtol=1e-5)

    print("KERNEL_OK")
</pallas_src>

<mosaic_0001>
module attributes {stable_mosaic.version = 11 : i64} {
  func.func @dualcifar4_kernel(%arg0: i32, %arg1: memref<2x10xf32, #tpu.memory_space<vmem>>, %arg2: memref<2x10xf32, #tpu.memory_space<vmem>>, %arg3: memref<10x20xf32, #tpu.memory_space<vmem>>, %arg4: memref<10x20xf32, #tpu.memory_space<vmem>>, %arg5: memref<1x20xf32, #tpu.memory_space<vmem>>, %arg6: memref<20x3xf32, #tpu.memory_space<vmem>>, %arg7: memref<1x3xf32, #tpu.memory_space<vmem>>, %arg8: memref<2x3xf32, #tpu.memory_space<vmem>>) attributes {dimension_semantics = [#tpu.dimension_semantics<parallel>], iteration_bounds = array<i64: 1>, scalar_prefetch = 0 : i64, scratch_operands = 0 : i64, tpu.core_type = #tpu.core_type<tc>, window_params = [{transform_indices = @transform_0, window_bounds = array<i64: 2, 10>}, {transform_indices = @transform_1, window_bounds = array<i64: 2, 10>}, {pipeline_mode = #tpu.pipeline_mode<synchronous>, transform_indices = @transform_2, window_bounds = array<i64: 10, 20>}, {pipeline_mode = #tpu.pipeline_mode<synchronous>, transform_indices = @transform_3, window_bounds = array<i64: 10, 20>}, {pipeline_mode = #tpu.pipeline_mode<synchronous>, transform_indices = @transform_4, window_bounds = array<i64: 1, 20>}, {pipeline_mode = #tpu.pipeline_mode<synchronous>, transform_indices = @transform_5, window_bounds = array<i64: 20, 3>}, {pipeline_mode = #tpu.pipeline_mode<synchronous>, transform_indices = @transform_6, window_bounds = array<i64: 1, 3>}, {transform_indices = @transform_7, window_bounds = array<i64: 2, 3>}]} {
    %c0 = arith.constant 0 : index
    %c0_0 = arith.constant 0 : index
    %0 = vector.load %arg1[%c0, %c0_0] : memref<2x10xf32, #tpu.memory_space<vmem>>, vector<2x10xf32>
    %c0_1 = arith.constant 0 : index
    %c0_2 = arith.constant 0 : index
    %1 = vector.load %arg3[%c0_1, %c0_2] : memref<10x20xf32, #tpu.memory_space<vmem>>, vector<10x20xf32>
    %cst = arith.constant dense<0.000000e+00> : vector<2x20xf32>
    %2 = tpu.matmul %0, %1, %cst {dimension_numbers = #tpu.dot_dimension_numbers<[1], [0], [0], [1], [0, 0, 1, 1], [], []>} : vector<2x10xf32>, vector<10x20xf32>, vector<2x20xf32> -> vector<2x20xf32>
    %c0_3 = arith.constant 0 : index
    %c0_4 = arith.constant 0 : index
    %3 = vector.load %arg2[%c0_3, %c0_4] : memref<2x10xf32, #tpu.memory_space<vmem>>, vector<2x10xf32>
    %c0_5 = arith.constant 0 : index
    %c0_6 = arith.constant 0 : index
    %4 = vector.load %arg4[%c0_5, %c0_6] : memref<10x20xf32, #tpu.memory_space<vmem>>, vector<10x20xf32>
    %cst_7 = arith.constant dense<0.000000e+00> : vector<2x20xf32>
    %5 = tpu.matmul %3, %4, %cst_7 {dimension_numbers = #tpu.dot_dimension_numbers<[1], [0], [0], [1], [0, 0, 1, 1], [], []>} : vector<2x10xf32>, vector<10x20xf32>, vector<2x20xf32> -> vector<2x20xf32>
    %6 = arith.addf %2, %5 : vector<2x20xf32>
    %c0_8 = arith.constant 0 : index
    %c0_9 = arith.constant 0 : index
    %7 = vector.load %arg5[%c0_8, %c0_9] : memref<1x20xf32, #tpu.memory_space<vmem>>, vector<1x20xf32>
    %8 = vector.broadcast %7 : vector<1x20xf32> to vector<2x20xf32>
    %9 = arith.addf %6, %8 : vector<2x20xf32>
    %cst_10 = arith.constant 0.000000e+00 : f32
    %10 = vector.broadcast %cst_10 : f32 to vector<2x20xf32>
    %11 = arith.maximumf %9, %10 : vector<2x20xf32>
    %c0_11 = arith.constant 0 : index
    %c0_12 = arith.constant 0 : index
    %12 = vector.load %arg6[%c0_11, %c0_12] : memref<20x3xf32, #tpu.memory_space<vmem>>, vector<20x3xf32>
    %cst_13 = arith.constant dense<0.000000e+00> : vector<2x3xf32>
    %13 = tpu.matmul %11, %12, %cst_13 {dimension_numbers = #tpu.dot_dimension_numbers<[1], [0], [0], [1], [0, 0, 1, 1], [], []>} : vector<2x20xf32>, vector<20x3xf32>, vector<2x3xf32> -> vector<2x3xf32>
    %c0_14 = arith.constant 0 : index
    %c0_15 = arith.constant 0 : index
    %14 = vector.load %arg7[%c0_14, %c0_15] : memref<1x3xf32, #tpu.memory_space<vmem>>, vector<1x3xf32>
    %15 = vector.broadcast %14 : vector<1x3xf32> to vector<2x3xf32>
    %16 = arith.addf %13, %15 : vector<2x3xf32>
    %c0_16 = arith.constant 0 : index
    %c0_17 = arith.constant 0 : index
    %17 = vector.load %arg8[%c0_16, %c0_17] : memref<2x3xf32, #tpu.memory_space<vmem>>, vector<2x3xf32>
    tpu.vector_store %arg8[%c0_16, %c0_17], %16 {strides = array<i32>} : memref<2x3xf32, #tpu.memory_space<vmem>>, vector<2x3xf32>,
    return
  }
  func.func @transform_0(%arg0: i32) -> (i32, i32) {
    %c0_i32 = arith.constant 0 : i32
    %c0_i32_0 = arith.constant 0 : i32
    return %arg0, %c0_i32 : i32, i32
  }
  func.func @transform_1(%arg0: i32) -> (i32, i32) {
    %c0_i32 = arith.constant 0 : i32
    %c0_i32_0 = arith.constant 0 : i32
    return %arg0, %c0_i32 : i32, i32
  }
  func.func @transform_2(%arg0: i32) -> (i32, i32) {
    %c0_i32 = arith.constant 0 : i32
    %c0_i32_0 = arith.constant 0 : i32
    %c0_i32_1 = arith.constant 0 : i32
    return %c0_i32, %c0_i32_0 : i32, i32
  }
  func.func @transform_3(%arg0: i32) -> (i32, i32) {
    %c0_i32 = arith.constant 0 : i32
    %c0_i32_0 = arith.constant 0 : i32
    %c0_i32_1 = arith.constant 0 : i32
    return %c0_i32, %c0_i32_0 : i32, i32
  }
  func.func @transform_4(%arg0: i32) -> (i32, i32) {
    %c0_i32 = arith.constant 0 : i32
    %c0_i32_0 = arith.constant 0 : i32
    %c0_i32_1 = arith.constant 0 : i32
    return %c0_i32, %c0_i32_0 : i32, i32
  }
  func.func @transform_5(%arg0: i32) -> (i32, i32) {
    %c0_i32 = arith.constant 0 : i32
    %c0_i32_0 = arith.constant 0 : i32
    %c0_i32_1 = arith.constant 0 : i32
    return %c0_i32, %c0_i32_0 : i32, i32
  }
  func.func @transform_6(%arg0: i32) -> (i32, i32) {
    %c0_i32 = arith.constant 0 : i32
    %c0_i32_0 = arith.constant 0 : i32
    %c0_i32_1 = arith.constant 0 : i32
    return %c0_i32, %c0_i32_0 : i32, i32
  }
  func.func @transform_7(%arg0: i32) -> (i32, i32) {
    %c0_i32 = arith.constant 0 : i32
    %c0_i32_0 = arith.constant 0 : i32
    return %arg0, %c0_i32 : i32, i32
  }
}

</mosaic_0001>

<llo_original>
// kernel: tpu_custom_call.1
$region0: #{tpu_custom_call.1}
  #allocation0 [shape = 'u32[]', space=smem, size = 0x4, offset = 0x4, fixed_abs, tag = 'smem constant byte address 0x4 - core index']
  #allocation1 [shape = 'u32[72,128]{1,0:T(1,128)}', space=vmem, size = 0x9000, scoped, tag = 'internal scratch']
  %s0 = inlined_call_operand.vmem [shape: f32[2,10], index: 0, kind: input, shape index: {}]
  %s1 = inlined_call_operand.vmem [shape: f32[2,10], index: 1, kind: input, shape index: {}]
  %s2 = inlined_call_operand.vmem [shape: f32[10,20], index: 2, kind: input, shape index: {}]
  %s3 = inlined_call_operand.hbm [shape: f32[10,20], index: 3, kind: input, shape index: {}]
  %s4 = inlined_call_operand.vmem [shape: f32[1,20], index: 4, kind: input, shape index: {}]
  %s5 = inlined_call_operand.vmem [shape: f32[20,3], index: 5, kind: input, shape index: {}]
  %s6 = inlined_call_operand.vmem [shape: f32[1,3], index: 6, kind: input, shape index: {}]
  %s7 = inlined_call_operand.hbm [shape: f32[2,3], index: 7, kind: output, shape index: {}]
  %s8 = sld [smem:[#allocation0]]
  $region42: #{tpu_custom_call.1} parent=0
    _
  %s10 = ssub.s32 1, %s8
  %s11 = scalar_select 0, %s10, %s8
  $region1: #{tpu_custom_call.1} parent=0
    #allocation2 [shape = 'u8[8192]{0}', space=vmem, size = 0x2000, scoped, tag = 'input window, operand 3, single buffered']
    #allocation3 [shape = 's32[1]{0}', space=sflag, size = 0x4, scoped, tag = 'scoped memory for tpu_custom_call.1']
    #allocation4 [shape = 's32[1]{0}', space=sflag, size = 0x4, scoped, tag = 'scoped memory for tpu_custom_call.1']
    #allocation5 [shape = 'u8[1024]{0}', space=vmem, size = 0x400, scoped, tag = 'output window, operand 0, single buffered']
    %12 = vsyncpa [#allocation3], 0
    %13 = vsyncpa [#allocation4], 0
    // Predicated region
    $region2: #{tpu_custom_call.1} parent=1 // pred_check
      _
    $region3: #{tpu_custom_call.1} parent=1 // pred_check_branch
      %15 = sbr.rel (0) target = $region5
    $region4: #{tpu_custom_call.1} parent=1 // pred_region
      _
    $region5: #{tpu_custom_call.1} parent=1 // pred_fallthru
      _
    // Predicated region
    $region6: #{tpu_custom_call.1} parent=1 // pred_check
      _
    $region7: #{tpu_custom_call.1} parent=1 // pred_check_branch
      %17 = sbr.rel (0) target = $region9
    $region8: #{tpu_custom_call.1} parent=1 // pred_region
      _
    $region9: #{tpu_custom_call.1} parent=1 // pred_fallthru
      _
    // Predicated region
    $region10: #{tpu_custom_call.1} parent=1 // pred_check
      _
    $region11: #{tpu_custom_call.1} parent=1 // pred_check_branch
      %19 = sbr.rel (0) target = $region13
    $region12: #{tpu_custom_call.1} parent=1 // pred_region
      _
    $region13: #{tpu_custom_call.1} parent=1 // pred_fallthru
      _
    // Predicated region
    $region14: #{tpu_custom_call.1} parent=1 // pred_check
      _
    $region15: #{tpu_custom_call.1} parent=1 // pred_check_branch
      %21 = sbr.rel (0) target = $region17
    $region16: #{tpu_custom_call.1} parent=1 // pred_region
      %23 = vsyncadd [#allocation3], 0
      %s24 = sshll.u32 %s3, 4
      %s25 = int_to_ptr.hbm [resolvable:$true] %s24
      %s26 = sshll.u32 [#allocation2], 4
      %s27 = int_to_ptr.vmem [resolvable:$true] %s26
      %32 = dma.hbm_to_vmem [thread:$0]  %s25, 256, %s27, [#allocation3], 128, 128, 8
    $region17: #{tpu_custom_call.1} parent=1 // pred_fallthru
      _
    // Predicated region
    $region18: #{tpu_custom_call.1} parent=1 // pred_check
      _
    $region19: #{tpu_custom_call.1} parent=1 // pred_check_branch
      %34 = sbr.rel (0) target = $region21
    $region20: #{tpu_custom_call.1} parent=1 // pred_region
      _
    $region21: #{tpu_custom_call.1} parent=1 // pred_fallthru
      _
    // Predicated region
    $region22: #{tpu_custom_call.1} parent=1 // pred_check
      _
    $region23: #{tpu_custom_call.1} parent=1 // pred_check_branch
      %36 = sbr.rel (0) target = $region25
    $region24: #{tpu_custom_call.1} parent=1 // pred_region
      _
    $region25: #{tpu_custom_call.1} parent=1 // pred_fallthru
      _
    // Predicated region
    $region26: #{tpu_custom_call.1} parent=1 // pred_check
      _
    $region27: #{tpu_custom_call.1} parent=1 // pred_check_branch
      %38 = sbr.rel (0) target = $region29
    $region28: #{tpu_custom_call.1} parent=1 // pred_region
      _
    $region29: #{tpu_custom_call.1} parent=1 // pred_fallthru
      _
    // Predicated region
    $region30: #{tpu_custom_call.1} parent=1 // pred_check
      _
    $region31: #{tpu_custom_call.1} parent=1 // pred_check_branch
      %40 = sbr.rel (0) target = $region33
    $region32: #{tpu_custom_call.1} parent=1 // pred_region
      %42 = dma.done [#allocation3], 256
    $region33: #{tpu_custom_call.1} parent=1 // pred_fallthru
      _
    %v43 = vld [vmem:[%s0] sm:$0x3]
    %v44 = vld [vmem:[%s2] sm:$0xff]
    %v45 = vld [vmem:[%s2 + $0x8] sm:$0x3]
    %v46 = vld [vmem:[%s1] sm:$0x3]
    %v47 = vld [vmem:[#allocation2] sm:$0xff]
    %v48 = vld [vmem:[#allocation2 + $0x8] sm:$0x3]
    %vm49 = vcmask 80896
    %v51 = vsel %vm49, %v46, 0
    %vm53 = vcmask 1041408
    %v55 = vsel %vm53, %v48, 0
    %57 = vmatpush.msra.mxu0 0.0
    %58 = vmatpush.msra.mxu0 0.0
    %59 = vmatpush.msra.mxu0 0.0
    %60 = vmatpush.msra.mxu0 0.0
    %61 = vmatpush.msra.mxu0 0.0
    %62 = vmatpush.msra.mxu0 0.0
    %63 = vmatpush.msra.mxu0 0.0
    %64 = vmatpush.msra.mxu0 0.0
    %65 = vmatpush.msra.mxu0 0.0
    %66 = vmatpush.msra.mxu0 0.0
    %67 = vmatpush.msra.mxu0 0.0
    %68 = vmatpush.msra.mxu0 0.0
    %69 = vmatpush.msra.mxu0 0.0
    %70 = vmatpush.msra.mxu0 0.0
    %71 = vmatpush.msra.mxu0 %v55
    %72 = vmatpush.msra.mxu0 %v47
    %73 = vmatmul.f32.gmra.mxu0 %v51
    %v74 = vpop.f32.mrf.mxu0
    %v75 = vadd.f32 0.0, %v74
    %76 = vdwg.mxu0
    %v78 = vsel %vm49, %v43, 0
    %v81 = vsel %vm53, %v45, 0
    %83 = vmatpush.msra.mxu0 0.0
    %84 = vmatpush.msra.mxu0 0.0
    %85 = vmatpush.msra.mxu0 0.0
    %86 = vmatpush.msra.mxu0 0.0
    %87 = vmatpush.msra.mxu0 0.0
    %88 = vmatpush.msra.mxu0 0.0
    %89 = vmatpush.msra.mxu0 0.0
    %90 = vmatpush.msra.mxu0 0.0
    %91 = vmatpush.msra.mxu0 0.0
    %92 = vmatpush.msra.mxu0 0.0
    %93 = vmatpush.msra.mxu0 0.0
    %94 = vmatpush.msra.mxu0 0.0
    %95 = vmatpush.msra.mxu0 0.0
    %96 = vmatpush.msra.mxu0 0.0
    %97 = vmatpush.msra.mxu0 %v81
    %98 = vmatpush.msra.mxu0 %v44
    %99 = vmatmul.f32.gmra.mxu0 %v78
    %v100 = vpop.f32.mrf.mxu0
    %v101 = vadd.f32 %v75, %v100
    %102 = vdwg.mxu0
    %v103 = vld [vmem:[%s4] sm:$0x1]
    %v105 = vperm.slane %v103, 0
    %v107 = vadd.f32 %v101, %v105
    %v108 = vmax.f32 %v107, 0.0
    %v109 = vld [vmem:[%s5] sm:$0xff]
    %v110 = vld [vmem:[%s5 + $0x8] sm:$0xff]
    %v111 = vld [vmem:[%s5 + $0x10] sm:$0xf]
    %v112 = vld [vmem:[%s6] sm:$0x1]
    %v114 = vperm.slane %v112, 0
    %vm116 = vcmask 162816
    %v118 = vsel %vm116, %v108, 0
    %vm120 = vcmask 1043456
    %v122 = vsel %vm120, %v111, 0
    %124 = vmatpush.msra.mxu0 0.0
    %125 = vmatpush.msra.mxu0 0.0
    %126 = vmatpush.msra.mxu0 0.0
    %127 = vmatpush.msra.mxu0 0.0
    %128 = vmatpush.msra.mxu0 0.0
    %129 = vmatpush.msra.mxu0 0.0
    %130 = vmatpush.msra.mxu0 0.0
    %131 = vmatpush.msra.mxu0 0.0
    %132 = vmatpush.msra.mxu0 0.0
    %133 = vmatpush.msra.mxu0 0.0
    %134 = vmatpush.msra.mxu0 0.0
    %135 = vmatpush.msra.mxu0 0.0
    %136 = vmatpush.msra.mxu0 0.0
    %137 = vmatpush.msra.mxu0 %v122
    %138 = vmatpush.msra.mxu0 %v110
    %139 = vmatpush.msra.mxu0 %v109
    %140 = vmatmul.f32.gmra.mxu0 %v118
    %v141 = vpop.f32.mrf.mxu0
    %v142 = vadd.f32 %v114, %v141
    %143 = vdwg.mxu0
    %vm144 = vcmask 17408
    %145 = vst.msk [vmem:[#allocation5] sm:$0x3] %vm144, %v142
    // Predicated region
    $region34: #{tpu_custom_call.1} parent=1 // pred_check
      _
    $region35: #{tpu_custom_call.1} parent=1 // pred_check_branch
      %147 = sbr.rel (0) target = $region37
    $region36: #{tpu_custom_call.1} parent=1 // pred_region
      %149 = vsyncadd [#allocation4], 0
      %s151 = sshll.u32 [#allocation5], 4
      %s152 = int_to_ptr.vmem [resolvable:$true] %s151
      %s153 = sshll.u32 %s7, 4
      %s154 = int_to_ptr.hbm [resolvable:$true] %s153
      %156 = dma.vmem_to_hbm [thread:$0]  %s152, 32, %s154, [#allocation4]
    $region37: #{tpu_custom_call.1} parent=1 // pred_fallthru
      _
    // Predicated region
    $region38: #{tpu_custom_call.1} parent=1 // pred_check
      _
    $region39: #{tpu_custom_call.1} parent=1 // pred_check_branch
      %158 = sbr.rel (0) target = $region41
    $region40: #{tpu_custom_call.1} parent=1 // pred_region
      %160 = dma.done [#allocation4], 32
    $region41: #{tpu_custom_call.1} parent=1 // pred_fallthru
      _
    %161 = vsyncpa [#allocation3], 1
    %162 = vsyncpa [#allocation4], 1

</llo_original>
